<compile_context>
chip_gen: v5e
topology: v5e:2x2
jax: 0.10.0
libtpu: 0.0.40
codegen_flags: <defaults>
</compile_context>

<pallas_src>
import jax
import jax.numpy as jnp
from jax.experimental import pallas as pl
from jax.experimental.pallas import tpu as pltpu

EMBED_DIM = 8
HIDDEN_DIM = 8

_LANES = 128
# Packed rows (128 lanes = 16 logical rows each) per grid step.
# 8192 packed rows -> 4 MiB per f32 input buffer; 2 inputs double-buffered
# (16 MiB) + tile-sized intermediates (~8 MiB) + output (~1 MiB) ~= 26 MiB,
# comfortably under the 48 MiB scoped limit and v7x's 64 MiB physical VMEM.
_TM_PACKED_TARGET = 8192
_VMEM_LIMIT_BYTES = 48 * 1024 * 1024
_MIN_GRID_STEPS = 4          # give megacore ('parallel') something to split
_SUBLANE_ALIGN = 16          # multiple of 16 rows: safe for f32 and bf16 tiles


def _round_up(x, m):
    return ((x + m - 1) // m) * m


def _cross_attention_kernel(src_ref, tgt_ref, a_mat_ref, b_mat_ref, bias_ref,
                            out_ref):
    # src/tgt: (TM, 128) packed, 16 logical rows of E=8 per vreg row.
    # Cast to f32 in-kernel so bf16 inputs stay bf16 through HBM (BW-bound).
    x = src_ref[...].astype(jnp.float32)
    y = tgt_ref[...].astype(jnp.float32)

    diff = jnp.abs(x - y)            # |source - target|   (lane-dense, VPU)
    prod = x * y                     # source * target

    # Block-diagonal folded weights: (128, 16).  One tiny MXU matmul per tile
    # performs both the weight multiply and the per-row 8-lane reduction.
    att = (jnp.dot(diff, a_mat_ref[...], preferred_element_type=jnp.float32)
           + jnp.dot(prod, b_mat_ref[...], preferred_element_type=jnp.float32)
           + bias_ref[0])            # scalar bias from SMEM

    out_ref[...] = jnp.tanh(att)     # (TM, 16)


def cross_attention(source, target, w_left, w_right, w_tot, b_tot):
    """source/target: (B, S, E); returns (B, S, 1) float32."""
    B, S, E = source.shape
    H = w_left.shape[0]
    M = B * S

    # TODO(synk): packing assumes 128 % E == 0 (true for embed_dim=8).
    assert _LANES % E == 0, "embed_dim must divide 128 for lane packing"
    G = _LANES // E                  # logical rows per packed row (16 for E=8)

    f32 = jnp.float32

    # ---- Fold W_tot into the first-layer weights (no intermediate
    #      nonlinearity between the Linear layers, so this is exact up to
    #      fp summation order).  Tiny arrays; done in f32.
    w_left = w_left.astype(f32)
    w_right = w_right.astype(f32)
    w_tot = w_tot.astype(f32)
    v_left = w_left.T @ w_tot[0, :H]         # (E,)
    v_right = w_right.T @ w_tot[0, H:]       # (E,)

    # Block-diagonal (G*E, G) matrices: A[g*E + e, g] = v_left[e], else 0.
    eye_g = jnp.eye(G, dtype=f32)                                   # (G, G)
    a_mat = (eye_g[:, None, :] * v_left[None, :, None]).reshape(G * E, G)
    b_mat = (eye_g[:, None, :] * v_right[None, :, None]).reshape(G * E, G)

    bias = b_tot.reshape(1).astype(f32)       # (1,) scalar, lives in SMEM

    # ---- Pack inputs lane-dense: (M, E) -> (mp, 128) as a pure reshape.
    # No dtype change, no tile-multiple padding: only if M is not a multiple
    # of G do we pad by < G rows so the reshape stays contiguous.
    src2d = source.reshape(M, E)
    tgt2d = target.reshape(M, E)
    rem = M % G
    if rem:
        pad = ((0, G - rem), (0, 0))
        src2d = jnp.pad(src2d, pad)
        tgt2d = jnp.pad(tgt2d, pad)
    mp = src2d.shape[0] // G
    src_packed = src2d.reshape(mp, G * E)     # (mp, 128), same dtype as input
    tgt_packed = tgt2d.reshape(mp, G * E)

    # ---- Tile size: big enough to amortize per-step overhead, small enough
    #      to (a) fit VMEM and (b) leave >= _MIN_GRID_STEPS grid steps so the
    #      'parallel' axis can be sharded across both v7x TensorCores.
    tm_for_parallel = _round_up(-(-mp // _MIN_GRID_STEPS), _SUBLANE_ALIGN)
    tm = max(_SUBLANE_ALIGN, min(_TM_PACKED_TARGET, tm_for_parallel))

    grid = (pl.cdiv(mp, tm),)                 # ragged last tile handled by Pallas

    out = pl.pallas_call(
        _cross_attention_kernel,
        out_shape=jax.ShapeDtypeStruct((mp, G), f32),
        grid_spec=pltpu.PrefetchScalarGridSpec(
            num_scalar_prefetch=0,
            grid=grid,
            in_specs=[
                pl.BlockSpec((tm, G * E), lambda i: (i, 0)),   # source (packed)
                pl.BlockSpec((tm, G * E), lambda i: (i, 0)),   # target (packed)
                pl.BlockSpec((G * E, G), lambda i: (0, 0)),    # folded left wt
                pl.BlockSpec((G * E, G), lambda i: (0, 0)),    # folded right wt
                pl.BlockSpec(memory_space=pltpu.MemorySpace.SMEM),  # bias scalar
            ],
            out_specs=pl.BlockSpec((tm, G), lambda i: (i, 0)),
        ),
        compiler_params=pltpu.CompilerParams(
            dimension_semantics=("parallel",),        # shard rows across TCs (v7x)
            vmem_limit_bytes=_VMEM_LIMIT_BYTES,
        ),
    )(src_packed, tgt_packed, a_mat, b_mat, bias)

    # Unpack: (mp, G) row-major == logical row order; drop any padding rows.
    return out.reshape(mp * G)[:M].reshape(B, S, 1)


def _reference(source, target, w_left, w_right, w_tot, b_tot):
    left = jnp.abs(source - target) @ w_left.T
    right = (source * target) @ w_right.T
    att = jnp.concatenate([left, right], axis=2) @ w_tot.T + b_tot
    return jnp.tanh(att)


if __name__ == "__main__":
    key = jax.random.PRNGKey(0)
    k_src, k_tgt, k_wl, k_wr, k_wt, k_b = jax.random.split(key, 6)

    B, S, E, H = 2, 8, EMBED_DIM, HIDDEN_DIM

    source = jax.random.normal(k_src, (B, S, E), dtype=jnp.float32)
    target = jax.random.normal(k_tgt, (B, S, E), dtype=jnp.float32)

    # Deterministic parameter init (shapes follow nn.Linear: weight = (out, in)).
    w_left = jax.random.normal(k_wl, (H, E), dtype=jnp.float32) * 0.1
    w_right = jax.random.normal(k_wr, (H, E), dtype=jnp.float32) * 0.1
    w_tot = jax.random.normal(k_wt, (1, 2 * H), dtype=jnp.float32) * 0.1
    b_tot = jax.random.normal(k_b, (1,), dtype=jnp.float32) * 0.1

    score = cross_attention(source, target, w_left, w_right, w_tot, b_tot)
    score = jax.block_until_ready(score)

    ref = _reference(source, target, w_left, w_right, w_tot, b_tot)
    assert score.shape == (B, S, 1)
    assert jnp.allclose(score, ref, atol=1e-5, rtol=1e-5)

    print("KERNEL_OK")
</pallas_src>

<mosaic_0001>
module attributes {stable_mosaic.version = 11 : i64} {
  func.func @_cross_attention_kernel(%arg0: i32, %arg1: memref<16x128xf32, #tpu.memory_space<vmem>>, %arg2: memref<16x128xf32, #tpu.memory_space<vmem>>, %arg3: memref<128x16xf32, #tpu.memory_space<vmem>>, %arg4: memref<128x16xf32, #tpu.memory_space<vmem>>, %arg5: memref<1xf32, #tpu.memory_space<smem>>, %arg6: memref<16x16xf32, #tpu.memory_space<vmem>>) attributes {dimension_semantics = [#tpu.dimension_semantics<parallel>], iteration_bounds = array<i64: 1>, scalar_prefetch = 0 : i64, scratch_operands = 0 : i64, tpu.core_type = #tpu.core_type<tc>, window_params = [{transform_indices = @transform_0, window_bounds = array<i64: 16, 128>}, {transform_indices = @transform_1, window_bounds = array<i64: 16, 128>}, {pipeline_mode = #tpu.pipeline_mode<synchronous>, transform_indices = @transform_2, window_bounds = array<i64: 128, 16>}, {pipeline_mode = #tpu.pipeline_mode<synchronous>, transform_indices = @transform_3, window_bounds = array<i64: 128, 16>}, {transform_indices = @transform_4, window_bounds = array<i64: 1>}, {transform_indices = @transform_5, window_bounds = array<i64: 16, 16>}]} {
    %c0 = arith.constant 0 : index
    %c0_0 = arith.constant 0 : index
    %0 = vector.load %arg1[%c0, %c0_0] : memref<16x128xf32, #tpu.memory_space<vmem>>, vector<16x128xf32>
    %c0_1 = arith.constant 0 : index
    %c0_2 = arith.constant 0 : index
    %1 = vector.load %arg2[%c0_1, %c0_2] : memref<16x128xf32, #tpu.memory_space<vmem>>, vector<16x128xf32>
    %2 = arith.subf %0, %1 : vector<16x128xf32>
    %3 = math.absf %2 : vector<16x128xf32>
    %4 = arith.mulf %0, %1 : vector<16x128xf32>
    %c0_3 = arith.constant 0 : index
    %c0_4 = arith.constant 0 : index
    %5 = vector.load %arg3[%c0_3, %c0_4] : memref<128x16xf32, #tpu.memory_space<vmem>>, vector<128x16xf32>
    %cst = arith.constant dense<0.000000e+00> : vector<16x16xf32>
    %6 = tpu.matmul %3, %5, %cst {dimension_numbers = #tpu.dot_dimension_numbers<[1], [0], [0], [1], [0, 0, 1, 1], [], []>} : vector<16x128xf32>, vector<128x16xf32>, vector<16x16xf32> -> vector<16x16xf32>
    %c0_5 = arith.constant 0 : index
    %c0_6 = arith.constant 0 : index
    %7 = vector.load %arg4[%c0_5, %c0_6] : memref<128x16xf32, #tpu.memory_space<vmem>>, vector<128x16xf32>
    %cst_7 = arith.constant dense<0.000000e+00> : vector<16x16xf32>
    %8 = tpu.matmul %4, %7, %cst_7 {dimension_numbers = #tpu.dot_dimension_numbers<[1], [0], [0], [1], [0, 0, 1, 1], [], []>} : vector<16x128xf32>, vector<128x16xf32>, vector<16x16xf32> -> vector<16x16xf32>
    %9 = arith.addf %6, %8 : vector<16x16xf32>
    %c0_8 = arith.constant 0 : index
    %10 = memref.load %arg5[%c0_8] : memref<1xf32, #tpu.memory_space<smem>>
    %11 = vector.broadcast %10 : f32 to vector<16x16xf32>
    %12 = arith.addf %9, %11 : vector<16x16xf32>
    %13 = math.tanh %12 : vector<16x16xf32>
    %c0_9 = arith.constant 0 : index
    %c0_10 = arith.constant 0 : index
    %14 = vector.load %arg6[%c0_9, %c0_10] : memref<16x16xf32, #tpu.memory_space<vmem>>, vector<16x16xf32>
    tpu.vector_store %arg6[%c0_9, %c0_10], %13 {strides = array<i32>} : memref<16x16xf32, #tpu.memory_space<vmem>>, vector<16x16xf32>,
    return
  }
  func.func @transform_0(%arg0: i32) -> (i32, i32) {
    %c0_i32 = arith.constant 0 : i32
    %c0_i32_0 = arith.constant 0 : i32
    return %arg0, %c0_i32 : i32, i32
  }
  func.func @transform_1(%arg0: i32) -> (i32, i32) {
    %c0_i32 = arith.constant 0 : i32
    %c0_i32_0 = arith.constant 0 : i32
    return %arg0, %c0_i32 : i32, i32
  }
  func.func @transform_2(%arg0: i32) -> (i32, i32) {
    %c0_i32 = arith.constant 0 : i32
    %c0_i32_0 = arith.constant 0 : i32
    %c0_i32_1 = arith.constant 0 : i32
    return %c0_i32, %c0_i32_0 : i32, i32
  }
  func.func @transform_3(%arg0: i32) -> (i32, i32) {
    %c0_i32 = arith.constant 0 : i32
    %c0_i32_0 = arith.constant 0 : i32
    %c0_i32_1 = arith.constant 0 : i32
    return %c0_i32, %c0_i32_0 : i32, i32
  }
  func.func @transform_4(%arg0: i32) -> i32 {
    %c0_i32 = arith.constant 0 : i32
    %c0_i32_0 = arith.constant 0 : i32
    return %c0_i32 : i32
  }
  func.func @transform_5(%arg0: i32) -> (i32, i32) {
    %c0_i32 = arith.constant 0 : i32
    %c0_i32_0 = arith.constant 0 : i32
    return %arg0, %c0_i32 : i32, i32
  }
}

</mosaic_0001>

<llo_original>
// kernel: tpu_custom_call.1
$region0: #{tpu_custom_call.1}
  #allocation0 [shape = 'u32[]', space=smem, size = 0x4, offset = 0x4, fixed_abs, tag = 'smem constant byte address 0x4 - core index']
  #allocation1 [shape = 'u32[72,128]{1,0:T(1,128)}', space=vmem, size = 0x9000, scoped, tag = 'internal scratch']
  #allocation2 [shape = 'f32[1]{0:T(128)S(6)}', space=smem, size = 0x200, scoped, tag = 'scoped memory for tpu_custom_call.1']
  %s0 = inlined_call_operand.vmem [shape: f32[1,128], index: 0, kind: input, shape index: {}]
  %s1 = inlined_call_operand.vmem [shape: f32[1,128], index: 1, kind: input, shape index: {}]
  %s2 = inlined_call_operand.vmem [shape: f32[128,16], index: 2, kind: input, shape index: {}]
  %s3 = inlined_call_operand.vmem [shape: f32[128,16], index: 3, kind: input, shape index: {}]
  %s4 = inlined_call_operand.<no memory space> [shape: f32[1], index: 4, kind: input, shape index: {}]
  %s5 = inlined_call_operand.hbm [shape: f32[1,16], index: 5, kind: output, shape index: {}]
  %s6 = sld [smem:[#allocation0]]
  $region30: #{tpu_custom_call.1} parent=0
    _
  %s8 = ssub.s32 1, %s6
  %s9 = scalar_select 0, %s8, %s6
  %10 = sst [smem:[#allocation2]] %s4
  $region1: #{tpu_custom_call.1} parent=0
    #allocation3 [shape = 'u8[8192]{0}', space=vmem, size = 0x2000, scoped, tag = 'output window, operand 0, single buffered']
    #allocation4 [shape = 's32[1]{0}', space=sflag, size = 0x4, scoped, tag = 'scoped memory for tpu_custom_call.1']
    %11 = vsyncpa [#allocation4], 0
    // Predicated region
    $region2: #{tpu_custom_call.1} parent=1 // pred_check
      _
    $region3: #{tpu_custom_call.1} parent=1 // pred_check_branch
      %13 = sbr.rel (0) target = $region5
    $region4: #{tpu_custom_call.1} parent=1 // pred_region
      _
    $region5: #{tpu_custom_call.1} parent=1 // pred_fallthru
      _
    // Predicated region
    $region6: #{tpu_custom_call.1} parent=1 // pred_check
      _
    $region7: #{tpu_custom_call.1} parent=1 // pred_check_branch
      %15 = sbr.rel (0) target = $region9
    $region8: #{tpu_custom_call.1} parent=1 // pred_region
      _
    $region9: #{tpu_custom_call.1} parent=1 // pred_fallthru
      _
    // Predicated region
    $region10: #{tpu_custom_call.1} parent=1 // pred_check
      _
    $region11: #{tpu_custom_call.1} parent=1 // pred_check_branch
      %17 = sbr.rel (0) target = $region13
    $region12: #{tpu_custom_call.1} parent=1 // pred_region
      _
    $region13: #{tpu_custom_call.1} parent=1 // pred_fallthru
      _
    // Predicated region
    $region14: #{tpu_custom_call.1} parent=1 // pred_check
      _
    $region15: #{tpu_custom_call.1} parent=1 // pred_check_branch
      %19 = sbr.rel (0) target = $region17
    $region16: #{tpu_custom_call.1} parent=1 // pred_region
      _
    $region17: #{tpu_custom_call.1} parent=1 // pred_fallthru
      _
    // Predicated region
    $region18: #{tpu_custom_call.1} parent=1 // pred_check
      _
    $region19: #{tpu_custom_call.1} parent=1 // pred_check_branch
      %21 = sbr.rel (0) target = $region21
    $region20: #{tpu_custom_call.1} parent=1 // pred_region
      _
    $region21: #{tpu_custom_call.1} parent=1 // pred_fallthru
      _
    %v22 = vld [vmem:[%s0] sm:$0xff]
    %v23 = vld [vmem:[%s0 + $0x8] sm:$0xff]
    %v24 = vld [vmem:[%s1] sm:$0xff]
    %v25 = vld [vmem:[%s1 + $0x8] sm:$0xff]
    %v26 = vsub.f32 %v22, %v24
    %v27 = vsub.f32 %v23, %v25
    %v28 = vand.u32 2147483647, %v26
    %v29 = vand.u32 2147483647, %v27
    %v30 = vmul.f32 %v22, %v24
    %v31 = vmul.f32 %v23, %v25
    %v32 = vld [vmem:[%s2] sm:$0xff]
    %v33 = vld [vmem:[%s2 + $0x8] sm:$0xff]
    %v34 = vld [vmem:[%s2 + $0x10] sm:$0xff]
    %v35 = vld [vmem:[%s2 + $0x18] sm:$0xff]
    %v36 = vld [vmem:[%s2 + $0x20] sm:$0xff]
    %v37 = vld [vmem:[%s2 + $0x28] sm:$0xff]
    %v38 = vld [vmem:[%s2 + $0x30] sm:$0xff]
    %v39 = vld [vmem:[%s2 + $0x38] sm:$0xff]
    %v40 = vld [vmem:[%s2 + $0x40] sm:$0xff]
    %v41 = vld [vmem:[%s2 + $0x48] sm:$0xff]
    %v42 = vld [vmem:[%s2 + $0x50] sm:$0xff]
    %v43 = vld [vmem:[%s2 + $0x58] sm:$0xff]
    %v44 = vld [vmem:[%s2 + $0x60] sm:$0xff]
    %v45 = vld [vmem:[%s2 + $0x68] sm:$0xff]
    %v46 = vld [vmem:[%s2 + $0x70] sm:$0xff]
    %v47 = vld [vmem:[%s2 + $0x78] sm:$0xff]
    %v48 = vld [vmem:[%s3] sm:$0xff]
    %v49 = vld [vmem:[%s3 + $0x8] sm:$0xff]
    %v50 = vld [vmem:[%s3 + $0x10] sm:$0xff]
    %v51 = vld [vmem:[%s3 + $0x18] sm:$0xff]
    %v52 = vld [vmem:[%s3 + $0x20] sm:$0xff]
    %v53 = vld [vmem:[%s3 + $0x28] sm:$0xff]
    %v54 = vld [vmem:[%s3 + $0x30] sm:$0xff]
    %v55 = vld [vmem:[%s3 + $0x38] sm:$0xff]
    %v56 = vld [vmem:[%s3 + $0x40] sm:$0xff]
    %v57 = vld [vmem:[%s3 + $0x48] sm:$0xff]
    %v58 = vld [vmem:[%s3 + $0x50] sm:$0xff]
    %v59 = vld [vmem:[%s3 + $0x58] sm:$0xff]
    %v60 = vld [vmem:[%s3 + $0x60] sm:$0xff]
    %v61 = vld [vmem:[%s3 + $0x68] sm:$0xff]
    %v62 = vld [vmem:[%s3 + $0x70] sm:$0xff]
    %v63 = vld [vmem:[%s3 + $0x78] sm:$0xff]
    %64 = vmatpush.msra.mxu0 %v63
    %65 = vmatpush.msra.mxu0 %v62
    %66 = vmatpush.msra.mxu0 %v61
    %67 = vmatpush.msra.mxu0 %v60
    %68 = vmatpush.msra.mxu0 %v59
    %69 = vmatpush.msra.mxu0 %v58
    %70 = vmatpush.msra.mxu0 %v57
    %71 = vmatpush.msra.mxu0 %v56
    %72 = vmatpush.msra.mxu0 %v55
    %73 = vmatpush.msra.mxu0 %v54
    %74 = vmatpush.msra.mxu0 %v53
    %75 = vmatpush.msra.mxu0 %v52
    %76 = vmatpush.msra.mxu0 %v51
    %77 = vmatpush.msra.mxu0 %v50
    %78 = vmatpush.msra.mxu0 %v49
    %79 = vmatpush.msra.mxu0 %v48
    %80 = vmatmul.f32.gmra.mxu0 %v30
    %v81 = vpop.f32.mrf.mxu0
    %v82 = vadd.f32 0.0, %v81
    %83 = vmatmul.f32.gmra.mxu0 %v31
    %v84 = vpop.f32.mrf.mxu0
    %v85 = vadd.f32 0.0, %v84
    %86 = vdwg.mxu0
    %87 = vmatpush.msra.mxu0 %v47
    %88 = vmatpush.msra.mxu0 %v46
    %89 = vmatpush.msra.mxu0 %v45
    %90 = vmatpush.msra.mxu0 %v44
    %91 = vmatpush.msra.mxu0 %v43
    %92 = vmatpush.msra.mxu0 %v42
    %93 = vmatpush.msra.mxu0 %v41
    %94 = vmatpush.msra.mxu0 %v40
    %95 = vmatpush.msra.mxu0 %v39
    %96 = vmatpush.msra.mxu0 %v38
    %97 = vmatpush.msra.mxu0 %v37
    %98 = vmatpush.msra.mxu0 %v36
    %99 = vmatpush.msra.mxu0 %v35
    %100 = vmatpush.msra.mxu0 %v34
    %101 = vmatpush.msra.mxu0 %v33
    %102 = vmatpush.msra.mxu0 %v32
    %103 = vmatmul.f32.gmra.mxu0 %v28
    %v104 = vpop.f32.mrf.mxu0
    %v105 = vadd.f32 %v82, %v104
    %106 = vmatmul.f32.gmra.mxu0 %v29
    %v107 = vpop.f32.mrf.mxu0
    %v108 = vadd.f32 %v85, %v107
    %109 = vdwg.mxu0
    %s110 = sld [smem:[#allocation2]]
    %v111 = vstv %s110
    %v112 = vadd.f32 %v105, %v111
    %v113 = vadd.f32 %v108, %v111
    %v114 = vtanh.pop %v112
    %v115 = vtanh.pop %v113
    %vm116 = vcmask 130048
    %117 = vst.msk [vmem:[#allocation3] sm:$0xff] %vm116, %v114
    %118 = vst.msk [vmem:[#allocation3 + $0x8] sm:$0xff] %vm116, %v115
    // Predicated region
    $region22: #{tpu_custom_call.1} parent=1 // pred_check
      _
    $region23: #{tpu_custom_call.1} parent=1 // pred_check_branch
      %120 = sbr.rel (0) target = $region25
    $region24: #{tpu_custom_call.1} parent=1 // pred_region
      %122 = vsyncadd [#allocation4], 240
      %s123 = sshll.u32 [#allocation3], 4
      %s124 = int_to_ptr.vmem [resolvable:$true] %s123
      %s125 = sshll.u32 %s5, 4
      %s126 = int_to_ptr.hbm [resolvable:$true] %s125
      %131 = dma.vmem_to_hbm [thread:$0]  %s124, 16, %s126, [#allocation4], 16, 16, 1
    $region25: #{tpu_custom_call.1} parent=1 // pred_fallthru
      _
    // Predicated region
    $region26: #{tpu_custom_call.1} parent=1 // pred_check
      _
    $region27: #{tpu_custom_call.1} parent=1 // pred_check_branch
      %133 = sbr.rel (0) target = $region29
    $region28: #{tpu_custom_call.1} parent=1 // pred_region
      %135 = dma.done [#allocation4], 256
    $region29: #{tpu_custom_call.1} parent=1 // pred_fallthru
      _
    %136 = vsyncpa [#allocation4], 1

</llo_original>
